<compile_context>
chip_gen: v7x
topology: tpu7x:2x2x1
jax: 0.10.0
libtpu: 0.0.40
codegen_flags: <defaults>
</compile_context>

<pallas_src>
import functools
import math

import jax
import jax.numpy as jnp
from jax.experimental import pallas as pl
from jax.experimental.pallas import tpu as pltpu


def _newspike_kernel(x_ref, seg_ref, o_ref, *, T: int):
    """x_ref/o_ref: (tile_r, lanes); seg_ref: (lanes, lanes) resident constant.

    Lane l of a row holds pixel (l // T), time step (l % T) of PACK packed
    pixels.  seg_ref[i, j] = 1/(T*theta) iff lanes i, j belong to the same
    pixel, so x @ seg directly yields a = v/theta broadcast to each pixel's
    T lanes.
    """
    lanes = x_ref.shape[-1]

    # Temporal group-sum on the MXU (free filler in a mem-bound kernel).
    # bf16 operands are exact for 0/1 spikes; accumulation is f32.
    x = x_ref[...].astype(jnp.bfloat16)
    a = jnp.dot(x, seg_ref[...], preferred_element_type=jnp.float32)

    # Per-lane time index t = lane % T (constant per lane, broadcast over rows).
    t = (jax.lax.broadcasted_iota(jnp.int32, (1, lanes), 1) % T).astype(jnp.float32)

    # Closed-form soft-reset IF: spike at step t iff floor((t+1)a) - floor(ta) >= 1.
    ta = t * a
    spikes = (jnp.floor(ta + a) - jnp.floor(ta)) >= 1.0
    o_ref[...] = spikes.astype(o_ref.dtype)


def _closed_form_spikes(x2: jax.Array, T: int, theta: float) -> jax.Array:
    """Tiny pure-jnp epilogue for the (< PACK) unaligned leftover pixels."""
    v = jnp.sum(x2.astype(jnp.float32), axis=-1, keepdims=True) / (T * theta)
    t = jnp.arange(T, dtype=jnp.float32)[None, :]
    ta = t * v
    return ((jnp.floor(ta + v) - jnp.floor(ta)) >= 1.0).astype(jnp.float32)


def _round_up(x: int, m: int) -> int:
    return ((x + m - 1) // m) * m


def new_spike(x: jax.Array, T: int = 16, theta: float = 1.0,
              tile_rows: int = 8192) -> jax.Array:
    """x: (N, C, H, W, T) -> spikes (N, C, H, W, T), float32."""
    N, C, H, W, T_in = x.shape
    assert T_in == T, f"last dim of x must equal T={T}, got {T_in}"

    M = N * C * H * W
    # Smallest pixel pack so that lanes = PACK*T is a multiple of 128
    # (lane-dense, unmasked stores).  PACK == 8 for the default T = 16.
    PACK = 128 // math.gcd(128, T)
    lanes = PACK * T

    x2 = x.reshape(M, T)                       # contiguous, zero-copy view
    M_aligned = (M // PACK) * PACK
    rem = M - M_aligned

    out_parts = []
    if M_aligned:
        R = M_aligned // PACK
        x_main = x2[:M_aligned].reshape(R, lanes)   # contiguous slice+reshape

        # Block-diagonal group-sum matrix, pre-scaled by 1/(T*theta), bf16.
        gidx = jnp.arange(lanes, dtype=jnp.int32) // T
        seg = ((gidx[:, None] == gidx[None, :]).astype(jnp.float32)
               * (1.0 / (T * theta))).astype(jnp.bfloat16)

        # Tile selection: big blocks (~4 MiB) to amortize per-step overhead,
        # but guarantee >= MIN_STEPS grid steps when the array is large enough
        # (megacore sharding + double-buffered pipelining).
        MIN_STEPS = 8
        if R >= MIN_STEPS * 8:
            tile_r = min(tile_rows, _round_up(pl.cdiv(R, MIN_STEPS), 8))
            tile_r = max(8, (tile_r // 8) * 8)
        else:
            tile_r = R                           # single full-extent block
        grid = (pl.cdiv(R, tile_r),)

        kernel = functools.partial(_newspike_kernel, T=T)

        itemsize = 4  # f32 in / f32 out
        cost = pl.CostEstimate(
            flops=2 * R * lanes * lanes,
            transcendentals=0,
            bytes_accessed=2 * R * lanes * itemsize + lanes * lanes * 2,
        )

        out_main = pl.pallas_call(
            kernel,
            out_shape=jax.ShapeDtypeStruct((R, lanes), jnp.float32),
            grid_spec=pltpu.PrefetchScalarGridSpec(
                num_scalar_prefetch=0,
                grid=grid,
                in_specs=[
                    pl.BlockSpec((tile_r, lanes), lambda i: (i, 0)),
                    # constant block index -> fetched once, stays resident
                    pl.BlockSpec((lanes, lanes), lambda i: (0, 0)),
                ],
                out_specs=pl.BlockSpec((tile_r, lanes), lambda i: (i, 0)),
            ),
            compiler_params=pltpu.CompilerParams(
                dimension_semantics=("parallel",),   # megacore sharding
                vmem_limit_bytes=32 * 1024 * 1024,   # keep big tiles legal on v5e
            ),
            cost_estimate=cost,
        )(x_main, seg)
        out_parts.append(out_main.reshape(M_aligned, T))

    if rem:
        # TODO(synk): leftover (<PACK) pixels handled with a tiny jnp epilogue
        # instead of padding the kernel input (avoids a full extra HBM pass).
        out_parts.append(_closed_form_spikes(x2[M_aligned:], T, theta))

    out2 = out_parts[0] if len(out_parts) == 1 else jnp.concatenate(out_parts, axis=0)
    return out2.reshape(N, C, H, W, T)


def _new_spike_ref(x, T=16, theta=1.0):
    """Pure-JAX reference (step-by-step soft-reset IF) for verification."""
    v = jnp.sum(x.astype(jnp.float32), axis=4) / T
    u = jnp.zeros_like(v)
    spikes = []
    for _ in range(T):
        u = u + v
        s = (u >= theta).astype(jnp.float32)
        u = u - s * theta
        spikes.append(s)
    return jnp.stack(spikes, axis=-1)


if __name__ == "__main__":
    key = jax.random.PRNGKey(0)
    T = 16
    N, C, H, W = 2, 4, 16, 16
    # Inputs are spike trains (0/1) in the VGG SNN model.
    x = (jax.random.uniform(key, (N, C, H, W, T)) > 0.5).astype(jnp.float32)

    out = jax.block_until_ready(new_spike(x, T=T))
    ref = _new_spike_ref(x, T=T)

    assert out.shape == (N, C, H, W, T)
    assert out.dtype == jnp.float32
    assert jnp.array_equal(out, ref), "mismatch vs. reference"
    print("KERNEL_OK")
</pallas_src>

<mosaic_0001>
module attributes {stable_mosaic.version = 11 : i64} {
  func.func @_newspike_kernel(%arg0: i32, %arg1: memref<32x128xf32, #tpu.memory_space<vmem>>, %arg2: memref<128x128xbf16, #tpu.memory_space<vmem>>, %arg3: memref<32x128xf32, #tpu.memory_space<vmem>>) attributes {dimension_semantics = [#tpu.dimension_semantics<parallel>], iteration_bounds = array<i64: 8>, scalar_prefetch = 0 : i64, scratch_operands = 0 : i64, tpu.core_type = #tpu.core_type<tc>, window_params = [{transform_indices = @transform_0, window_bounds = array<i64: 32, 128>}, {pipeline_mode = #tpu.pipeline_mode<synchronous>, transform_indices = @transform_1, window_bounds = array<i64: 128, 128>}, {transform_indices = @transform_2, window_bounds = array<i64: 32, 128>}]} {
    %c0 = arith.constant 0 : index
    %c0_0 = arith.constant 0 : index
    %0 = vector.load %arg1[%c0, %c0_0] : memref<32x128xf32, #tpu.memory_space<vmem>>, vector<32x128xf32>
    %1 = arith.truncf %0 : vector<32x128xf32> to vector<32x128xbf16>
    %c0_1 = arith.constant 0 : index
    %c0_2 = arith.constant 0 : index
    %2 = vector.load %arg2[%c0_1, %c0_2] : memref<128x128xbf16, #tpu.memory_space<vmem>>, vector<128x128xbf16>
    %cst = arith.constant dense<0.000000e+00> : vector<32x128xf32>
    %3 = tpu.matmul %1, %2, %cst {dimension_numbers = #tpu.dot_dimension_numbers<[1], [0], [0], [1], [0, 0, 1, 1], [], []>} : vector<32x128xbf16>, vector<128x128xbf16>, vector<32x128xf32> -> vector<32x128xf32>
    %4 = tpu.iota {dimensions = array<i32: 1>} : vector<1x128xi32>
    %c16_i32 = arith.constant 16 : i32
    %c0_i32 = arith.constant 0 : i32
    %5 = arith.cmpi eq, %c16_i32, %c0_i32 : i32
    %c1_i32 = arith.constant 1 : i32
    %6 = arith.select %5, %c1_i32, %c16_i32 : i32
    %7 = vector.broadcast %6 : i32 to vector<1x128xi32>
    %8 = arith.remsi %4, %7 : vector<1x128xi32>
    %c0_i32_3 = arith.constant 0 : i32
    %9 = vector.broadcast %c0_i32_3 : i32 to vector<1x128xi32>
    %10 = arith.cmpi ne, %8, %9 : vector<1x128xi32>
    %c0_i32_4 = arith.constant 0 : i32
    %11 = vector.broadcast %c0_i32_4 : i32 to vector<1x128xi32>
    %12 = arith.cmpi slt, %8, %11 : vector<1x128xi32>
    %c0_i32_5 = arith.constant 0 : i32
    %13 = arith.cmpi slt, %6, %c0_i32_5 : i32
    %14 = vector.broadcast %13 : i1 to vector<1x128xi1>
    %15 = vector.broadcast %14 : vector<1x128xi1> to vector<1x128xi1>
    %16 = arith.xori %12, %15 : vector<1x128xi1>
    %17 = arith.andi %16, %10 : vector<1x128xi1>
    %18 = vector.broadcast %6 : i32 to vector<1x128xi32>
    %19 = arith.addi %8, %18 : vector<1x128xi32>
    %20 = arith.select %17, %19, %8 : vector<1x128xi1>, vector<1x128xi32>
    %21 = arith.sitofp %20 : vector<1x128xi32> to vector<1x128xf32>
    %22 = vector.broadcast %21 : vector<1x128xf32> to vector<32x128xf32>
    %23 = arith.mulf %22, %3 : vector<32x128xf32>
    %24 = arith.addf %23, %3 : vector<32x128xf32>
    %25 = math.floor %24 : vector<32x128xf32>
    %26 = math.floor %23 : vector<32x128xf32>
    %27 = arith.subf %25, %26 : vector<32x128xf32>
    %cst_6 = arith.constant 1.000000e+00 : f32
    %28 = vector.broadcast %cst_6 : f32 to vector<32x128xf32>
    %29 = arith.cmpf oge, %27, %28 : vector<32x128xf32>
    %30 = arith.extui %29 : vector<32x128xi1> to vector<32x128xi32>
    %31 = arith.sitofp %30 : vector<32x128xi32> to vector<32x128xf32>
    %c0_7 = arith.constant 0 : index
    %c0_8 = arith.constant 0 : index
    %32 = vector.load %arg3[%c0_7, %c0_8] : memref<32x128xf32, #tpu.memory_space<vmem>>, vector<32x128xf32>
    tpu.vector_store %arg3[%c0_7, %c0_8], %31 {strides = array<i32>} : memref<32x128xf32, #tpu.memory_space<vmem>>, vector<32x128xf32>,
    return
  }
  func.func @transform_0(%arg0: i32) -> (i32, i32) {
    %c0_i32 = arith.constant 0 : i32
    %c0_i32_0 = arith.constant 0 : i32
    return %arg0, %c0_i32 : i32, i32
  }
  func.func @transform_1(%arg0: i32) -> (i32, i32) {
    %c0_i32 = arith.constant 0 : i32
    %c0_i32_0 = arith.constant 0 : i32
    %c0_i32_1 = arith.constant 0 : i32
    return %c0_i32, %c0_i32_0 : i32, i32
  }
  func.func @transform_2(%arg0: i32) -> (i32, i32) {
    %c0_i32 = arith.constant 0 : i32
    %c0_i32_0 = arith.constant 0 : i32
    return %arg0, %c0_i32 : i32, i32
  }
}

</mosaic_0001>

<llo_original>
// kernel: tpu_custom_call.1
$region0: #{tpu_custom_call.1}
  #allocation0 [shape = 'u32[]', space=smem, size = 0x4, offset = 0x4, fixed_abs, tag = 'smem constant byte address 0x4 - core index']
  #allocation1 [shape = 'u32[144,128]{1,0:T(1,128)}', space=vmem, size = 0x12000, scoped, tag = 'internal scratch']
  %s0 = inlined_call_operand.hbm [shape: f32[256,128], index: 0, kind: input, shape index: {}]
  %s1 = inlined_call_operand.hbm [shape: bf16[128,128], index: 1, kind: input, shape index: {}]
  %s2 = inlined_call_operand.hbm [shape: f32[256,128], index: 2, kind: output, shape index: {}]
  %s3 = sld [smem:[#allocation0]]
  $region49: #{tpu_custom_call.1} parent=0
    _
  %s5 = ssub.s32 1, %s3
  %s6 = scalar_select 0, %s5, %s3
  $region1: #{tpu_custom_call.1} parent=0
    #allocation2 [shape = 'u8[32768]{0}', space=vmem, size = 0x8000, scoped, tag = 'input window, operand 0']
    #allocation3 [shape = 's32[2]{0}', space=sflag, size = 0x8, scoped, tag = 'scoped memory for tpu_custom_call.1']
    #allocation4 [shape = 's32[2]{0}', space=sflag, size = 0x8, scoped, tag = 'scoped memory for tpu_custom_call.1']
    #allocation5 [shape = 'u8[32768]{0}', space=vmem, size = 0x8000, scoped, tag = 'input window, operand 1, single buffered']
    #allocation6 [shape = 's32[1]{0}', space=sflag, size = 0x4, scoped, tag = 'scoped memory for tpu_custom_call.1']
    #allocation7 [shape = 'u8[32768]{0}', space=vmem, size = 0x8000, scoped, tag = 'output window, operand 0']
    %7 = vsyncpa [#allocation3], 0
    %s8 = scalar_lea.sflag [#allocation3], 1
    %9 = vsyncpa %s8, 0
    %10 = vsyncpa [#allocation6], 0
    %11 = vsyncpa [#allocation4], 0
    %s12 = scalar_lea.sflag [#allocation4], 1
    %13 = vsyncpa %s12, 0
    loop: start=0, step=1, limit=10
    $region2: #{tpu_custom_call.1} parent=1 // loop_pre_header
      _
    $region3: #{tpu_custom_call.1} parent=1 // loop_header
      %s15 = sphi 0, %s19
      %p16 = scmp.ge.s32.totalorder %s15, 10
      %s25 = sphi 0, %s27
      %s28 = sphi 0, %s25
      %s29 = sphi 0, %s28
      %s45 = sphi 0, %s29
      %s49 = sphi 0, %s49
      %s51 = sphi 0, %s49
      %s52 = sphi 0, %s51
      %s66 = sphi 0, %s52
      %s72 = sphi 0, %s74
      %s75 = sphi 0, %s72
      %s76 = sphi 0, %s75
      %s92 = sphi 0, %s76
    $region4: #{tpu_custom_call.1} parent=1 // loop_header_branch
      %18 = sbr.rel (%p16) target = $region8
    $region5: #{tpu_custom_call.1} parent=1 // loop_body
      %s20 = ssub.s32 %s15, 1
      %s21 = ssub.s32 %s15, 2
      %s22 = sadd.s32 %s15, 1
      %s23 = ssub.s32 %s15, %s22
      %p24 = scmp.eq.s32.totalorder %s23, 0
      %s26 = sadd.s32 %s25, 1
      %s27 = scalar_select %p24, %s25, %s26
      %p30 = pneg %p24
      %p31 = scmp.eq.s32.totalorder %s15, 7
      %p32 = por %p30, %p31
      %p33 = scmp.ne.s32.totalorder %s25, %s28
      %p34 = scmp.eq.s32.totalorder %s15, 0
      %p35 = por %p33, %p34
      %p36 = scmp.ne.s32.totalorder %s25, %s28
      %p37 = scmp.eq.s32.totalorder %s20, 7
      %p38 = por %p36, %p37
      %p39 = scmp.ne.s32.totalorder %s28, %s29
      %p40 = scmp.eq.s32.totalorder %s20, 0
      %p41 = por %p39, %p40
      %p42 = scmp.ne.s32.totalorder %s28, %s29
      %p43 = scmp.eq.s32.totalorder %s21, 7
      %p44 = por %p42, %p43
      %p46 = scmp.ne.s32.totalorder %s29, %s45
      %p47 = scmp.eq.s32.totalorder %s21, 0
      %p48 = por %p46, %p47
      %s50 = sadd.s32 %s49, 1
      %p53 = scmp.eq.s32.totalorder %s15, 7
      %p54 = scmp.ne.s32.totalorder %s49, %s51
      %p55 = scmp.eq.s32.totalorder %s15, 0
      %p56 = por %p54, %p55
      %p57 = scmp.ne.s32.totalorder %s49, %s51
      %p58 = scmp.eq.s32.totalorder %s20, 7
      %p59 = por %p57, %p58
      %p60 = scmp.ne.s32.totalorder %s51, %s52
      %p61 = scmp.eq.s32.totalorder %s20, 0
      %p62 = por %p60, %p61
      %p63 = scmp.ne.s32.totalorder %s51, %s52
      %p64 = scmp.eq.s32.totalorder %s21, 7
      %p65 = por %p63, %p64
      %p67 = scmp.ne.s32.totalorder %s52, %s66
      %p68 = scmp.eq.s32.totalorder %s21, 0
      %p69 = por %p67, %p68
      %s70 = ssub.s32 %s15, %s22
      %p71 = scmp.eq.s32.totalorder %s70, 0
      %s73 = sadd.s32 %s72, 1
      %s74 = scalar_select %p71, %s72, %s73
      %p77 = pneg %p71
      %p78 = scmp.eq.s32.totalorder %s15, 7
      %p79 = por %p77, %p78
      %p80 = scmp.ne.s32.totalorder %s72, %s75
      %p81 = scmp.eq.s32.totalorder %s15, 0
      %p82 = por %p80, %p81
      %p83 = scmp.ne.s32.totalorder %s72, %s75
      %p84 = scmp.eq.s32.totalorder %s20, 7
      %p85 = por %p83, %p84
      %p86 = scmp.ne.s32.totalorder %s75, %s76
      %p87 = scmp.eq.s32.totalorder %s20, 0
      %p88 = por %p86, %p87
      %p89 = scmp.ne.s32.totalorder %s75, %s76
      %p90 = scmp.eq.s32.totalorder %s21, 7
      %p91 = por %p89, %p90
      %p93 = scmp.ne.s32.totalorder %s76, %s92
      %p94 = scmp.eq.s32.totalorder %s21, 0
      %p95 = por %p93, %p94
      %p96 = scmp.le.s32.totalorder 1, %s15
      %p97 = scmp.lt.s32.totalorder %s15, 9
      %p98 = pnand %p96, %p97
      %p99 = pneg %p98
      // Predicated region
      $region9: #{tpu_custom_call.1} parent=5 // pred_check
        _
      $region10: #{tpu_custom_call.1} parent=5 // pred_check_branch
        %101 = sbr.rel (%p98) target = $region12
      $region11: #{tpu_custom_call.1} parent=5 // pred_region
        %s102 = ssub.s32 %s15, 1
        // Predicated region
        $region13: #{tpu_custom_call.1} parent=11 // pred_check
          %p103 = pneg %p62
        $region14: #{tpu_custom_call.1} parent=11 // pred_check_branch
          %105 = sbr.rel (%p103) target = $region16
        $region15: #{tpu_custom_call.1} parent=11 // pred_region
          %s107 = ssub.s32 1024, 1024
          %108 = vsyncadd [#allocation6], %s107
          %s109 = sshll.u32 [#allocation5], 4
          %s110 = int_to_ptr.vmem [resolvable:$true] %s109
          %115 = dma.hbm_to_vmem [thread:$0]  %s1, 1024, %s110, [#allocation6], 64, 64, 4
        $region16: #{tpu_custom_call.1} parent=11 // pred_fallthru
          _
      $region12: #{tpu_custom_call.1} parent=5 // pred_fallthru
        _
      %p116 = scmp.lt.s32.totalorder %s15, 8
      // Predicated region
      $region17: #{tpu_custom_call.1} parent=5 // pred_check
        %p117 = pneg %p116
      $region18: #{tpu_custom_call.1} parent=5 // pred_check_branch
        %119 = sbr.rel (%p117) target = $region20
      $region19: #{tpu_custom_call.1} parent=5 // pred_region
        // Predicated region
        $region21: #{tpu_custom_call.1} parent=19 // pred_check
          %p120 = pneg %p35
        $region22: #{tpu_custom_call.1} parent=19 // pred_check_branch
          %122 = sbr.rel (%p120) target = $region24
        $region23: #{tpu_custom_call.1} parent=19 // pred_region
          %s123 = sand.u32 %s25, 1
          %s124 = scalar_lea.sflag [#allocation3], %s123
          %s125 = sand.u32 %s25, 1
          %s126 = smul.addr %s125, 32
          %s127 = scalar_lea.vmem [#allocation2], %s126
          %s128 = smul.u32 4, %s15
          %s130 = ssub.s32 512, 512
          %131 = vsyncadd %s124, %s130
          %s132 = smul.addr %s128, 128
          %s133 = scalar_lea.hbm %s0, %s132
          %s134 = sshll.u32 %s127, 4
          %s135 = int_to_ptr.vmem [resolvable:$true] %s134
          %140 = dma.hbm_to_vmem [thread:$0]  %s133, 512, %s135, %s124, 128, 128, 8
        $region24: #{tpu_custom_call.1} parent=19 // pred_fallthru
          _
      $region20: #{tpu_custom_call.1} parent=5 // pred_fallthru
        _
      %p141 = scmp.le.s32.totalorder 1, %s15
      %p142 = scmp.lt.s32.totalorder %s15, 9
      %p143 = pnand %p141, %p142
      %p144 = pneg %p143
      // Predicated region
      $region25: #{tpu_custom_call.1} parent=5 // pred_check
        _
      $region26: #{tpu_custom_call.1} parent=5 // pred_check_branch
        %146 = sbr.rel (%p143) target = $region28
      $region27: #{tpu_custom_call.1} parent=5 // pred_region
        %s147 = ssub.s32 %s15, 1
        %s148 = sand.u32 %s28, 1
        %s149 = scalar_lea.sflag [#allocation3], %s148
        %s150 = sand.u32 %s28, 1
        %s151 = smul.addr %s150, 32
        %s152 = scalar_lea.vmem [#allocation2], %s151
        // Predicated region
        $region29: #{tpu_custom_call.1} parent=27 // pred_check
          %p153 = pneg %p41
        $region30: #{tpu_custom_call.1} parent=27 // pred_check_branch
          %155 = sbr.rel (%p153) target = $region32
        $region31: #{tpu_custom_call.1} parent=27 // pred_region
          %156 = dma.done %s149, 512
        $region32: #{tpu_custom_call.1} parent=27 // pred_fallthru
          _
        // Predicated region
        $region33: #{tpu_custom_call.1} parent=27 // pred_check
          %p157 = pneg %p62
        $region34: #{tpu_custom_call.1} parent=27 // pred_check_branch
          %159 = sbr.rel (%p157) target = $region36
        $region35: #{tpu_custom_call.1} parent=27 // pred_region
          %160 = dma.done [#allocation6], 1024
        $region36: #{tpu_custom_call.1} parent=27 // pred_fallthru
          _
        %s161 = sand.u32 %s28, 1
        %s162 = scalar_lea.sflag [#allocation3], %s161
        %s163 = sand.u32 %s28, 1
        %s164 = smul.addr %s163, 32
        %s165 = scalar_lea.vmem [#allocation2], %s164
        %p166 = pneg %p41
        %p167 = pneg %p38
        %p168 = pneg %p62
        %p169 = pneg %p59
        %p170 = pneg %p88
        %p171 = pneg %p85
        %s172 = sand.u32 %s75, 1
        %s173 = scalar_lea.sflag [#allocation4], %s172
        %s174 = sand.u32 %s75, 1
        %s175 = smul.addr %s174, 32
        %s176 = scalar_lea.vmem [#allocation7], %s175
        %s177 = smul.u32 4, %s20
        %s178 = smul.u32 4, %s20
        %v180 = vld [vmem:[%s152] sm:$0xff]
        %v181 = vld [vmem:[%s152 + $0x8] sm:$0xff]
        %v182 = vld [vmem:[%s152 + $0x10] sm:$0xff]
        %v183 = vld [vmem:[%s152 + $0x18] sm:$0xff]
        %v184 = vpack.c.bf16 %v181, %v180
        %v185 = vpack.c.bf16 %v183, %v182
        %v186 = vld [vmem:[#allocation5] sm:$0xf]
        %v187 = vld [vmem:[#allocation5 + $0x4] sm:$0xf]
        %v188 = vld [vmem:[#allocation5 + $0x8] sm:$0xf]
        %v189 = vld [vmem:[#allocation5 + $0xc] sm:$0xf]
        %v190 = vld [vmem:[#allocation5 + $0x10] sm:$0xf]
        %v191 = vld [vmem:[#allocation5 + $0x14] sm:$0xf]
        %v192 = vld [vmem:[#allocation5 + $0x18] sm:$0xf]
        %v193 = vld [vmem:[#allocation5 + $0x1c] sm:$0xf]
        %v194 = vld [vmem:[#allocation5 + $0x20] sm:$0xf]
        %v195 = vld [vmem:[#allocation5 + $0x24] sm:$0xf]
        %v196 = vld [vmem:[#allocation5 + $0x28] sm:$0xf]
        %v197 = vld [vmem:[#allocation5 + $0x2c] sm:$0xf]
        %v198 = vld [vmem:[#allocation5 + $0x30] sm:$0xf]
        %v199 = vld [vmem:[#allocation5 + $0x34] sm:$0xf]
        %v200 = vld [vmem:[#allocation5 + $0x38] sm:$0xf]
        %v201 = vld [vmem:[#allocation5 + $0x3c] sm:$0xf]
        %v218 = vunpack.c.l.b16 %v186
        %v219 = vunpack.c.l.b16 %v187
        %v220 = vunpack.c.l.b16 %v188
        %v221 = vunpack.c.l.b16 %v189
        %v222 = vunpack.c.l.b16 %v190
        %v223 = vunpack.c.l.b16 %v191
        %v224 = vunpack.c.l.b16 %v192
        %v225 = vunpack.c.l.b16 %v193
        %v226 = vunpack.c.l.b16 %v194
        %v227 = vunpack.c.l.b16 %v195
        %v228 = vunpack.c.l.b16 %v196
        %v229 = vunpack.c.l.b16 %v197
        %v230 = vunpack.c.l.b16 %v198
        %v231 = vunpack.c.l.b16 %v199
        %v232 = vunpack.c.l.b16 %v200
        %v233 = vunpack.c.l.b16 %v201
        %v234 = vpack.c.b16 %v219, %v218
        %v235 = vpack.c.b16 %v221, %v220
        %v236 = vpack.c.b16 %v223, %v222
        %v237 = vpack.c.b16 %v225, %v224
        %v238 = vpack.c.b16 %v227, %v226
        %v239 = vpack.c.b16 %v229, %v228
        %v240 = vpack.c.b16 %v231, %v230
        %v241 = vpack.c.b16 %v233, %v232
        %250 = vmatprep.subr.bf16.mxu0 0
        %251 = vmatpush1.bf16.msra.mxu0 %v234
        %252 = vmatprep.subr.bf16.mxu0 0
        %253 = vmatpush1.bf16.msra.mxu0 %v235
        %254 = vmatprep.subr.bf16.mxu0 0
        %255 = vmatpush1.bf16.msra.mxu0 %v236
        %256 = vmatprep.subr.bf16.mxu0 0
        %257 = vmatpush1.bf16.msra.mxu0 %v237
        %258 = vmatprep.subr.bf16.mxu0 0
        %259 = vmatpush1.bf16.msra.mxu0 %v238
        %260 = vmatprep.subr.bf16.mxu0 0
        %261 = vmatpush1.bf16.msra.mxu0 %v239
        %262 = vmatprep.subr.bf16.mxu0 0
        %263 = vmatpush1.bf16.msra.mxu0 %v240
        %264 = vmatprep.subr.bf16.mxu0 0
        %265 = vmatpush1.bf16.msra.mxu0 %v241
        %266 = vmatprep.subr.bf16.mxu0 0
        %267 = vmatpush1.bf16.msra.mxu0 0
        %268 = vmatprep.subr.bf16.mxu0 0
        %269 = vmatpush1.bf16.msra.mxu0 0
        %270 = vmatprep.subr.bf16.mxu0 0
        %271 = vmatpush1.bf16.msra.mxu0 0
        %272 = vmatprep.subr.bf16.mxu0 0
        %273 = vmatpush1.bf16.msra.mxu0 0
        %274 = vmatprep.subr.bf16.mxu0 0
        %275 = vmatpush1.bf16.msra.mxu0 0
        %276 = vmatprep.subr.bf16.mxu0 0
        %277 = vmatpush1.bf16.msra.mxu0 0
        %278 = vmatprep.subr.bf16.mxu0 0
        %279 = vmatpush1.bf16.msra.mxu0 0
        %280 = vmatprep.subr.bf16.mxu0 0
        %281 = vmatpush1.bf16.msra.mxu0 0
        %282 = vmatprep.mubr.bf16.mxu0 0
        %283 = vmatmul.mubr.bf16.gmra.mrb[0].mxu0 %v184
        %v284 = vpop.f32.mrb[0].mxu0
        %v285 = vadd.f32 0.0, %v284
        %v286 = vpop.f32.mrb[0].mxu0
        %v287 = vpop.f32.mrb[0].mxu0
        %v288 = vadd.f32 0.0, %v287
        %v289 = vpop.f32.mrb[0].mxu0
        %290 = vmatprep.mubr.bf16.mxu0 0
        %291 = vmatmul.mubr.bf16.gmra.mrb[0].mxu0 %v185
        %v292 = vpop.f32.mrb[0].mxu0
        %v293 = vadd.f32 0.0, %v292
        %v294 = vpop.f32.mrb[0].mxu0
        %v295 = vpop.f32.mrb[0].mxu0
        %v296 = vadd.f32 0.0, %v295
        %v297 = vpop.f32.mrb[0].mxu0
        %298 = vdwg.mxu0
        %v299 = vlaneseq
        %v300 = vand.u32 %v299, 127
        %vm301 = vcmp.lt.s32.totalorder %v300, 0
        %v302 = vsub.s32 0, %v300
        %v303 = vsel %vm301, %v302, %v300
        %v304 = vshrl.u32 %v303, 4
        %v305 = vand.u32 %v303, 15
        %v306 = vsub.s32 0, %v305
        %v307 = vsel %vm301, %v306, %v305
        %vm308 = vcmp.ne.s32.totalorder %v307, 0
        %vm309 = vcmp.lt.s32.totalorder %v307, 0
        %vm310 = vmand %vm309, %vm308
        %v311 = vadd.s32 %v307, 16
        %v312 = vsel %vm310, %v311, %v307
        %v313 = vcvt.s32.f32 %v312
        %v314 = vmul.f32 %v313, %v285
        %v315 = vmul.f32 %v313, %v288
        %v316 = vmul.f32 %v313, %v293
        %v317 = vmul.f32 %v313, %v296
        %v318 = vadd.f32 %v314, %v285
        %v319 = vadd.f32 %v315, %v288
        %v320 = vadd.f32 %v316, %v293
        %v321 = vadd.f32 %v317, %v296
        %v322 = vfloor.f32 %v318
        %v323 = vfloor.f32 %v319
        %v324 = vfloor.f32 %v320
        %v325 = vfloor.f32 %v321
        %v326 = vfloor.f32 %v314
        %v327 = vfloor.f32 %v315
        %v328 = vfloor.f32 %v316
        %v329 = vfloor.f32 %v317
        %v330 = vsub.f32 %v322, %v326
        %v331 = vsub.f32 %v323, %v327
        %v332 = vsub.f32 %v324, %v328
        %v333 = vsub.f32 %v325, %v329
        %vm334 = vcmp.ge.f32.partialorder %v330, 1.0
        %vm335 = vcmp.ge.f32.partialorder %v331, 1.0
        %vm336 = vcmp.ge.f32.partialorder %v332, 1.0
        %vm337 = vcmp.ge.f32.partialorder %v333, 1.0
        %v338 = vsel %vm334, 1, 0
        %v339 = vsel %vm335, 1, 0
        %v340 = vsel %vm336, 1, 0
        %v341 = vsel %vm337, 1, 0
        %v342 = vcvt.s32.f32 %v338
        %v343 = vcvt.s32.f32 %v339
        %v344 = vcvt.s32.f32 %v340
        %v345 = vcvt.s32.f32 %v341
        %346 = vst [vmem:[%s176] sm:$0xff] %v342
        %347 = vst [vmem:[%s176 + $0x8] sm:$0xff] %v343
        %348 = vst [vmem:[%s176 + $0x10] sm:$0xff] %v344
        %349 = vst [vmem:[%s176 + $0x18] sm:$0xff] %v345
        %s350 = sand.u32 %s75, 1
        %s351 = scalar_lea.sflag [#allocation4], %s350
        %s352 = sand.u32 %s75, 1
        %s353 = smul.addr %s352, 32
        %s354 = scalar_lea.vmem [#allocation7], %s353
        // Predicated region
        $region37: #{tpu_custom_call.1} parent=27 // pred_check
          %p355 = pneg %p85
        $region38: #{tpu_custom_call.1} parent=27 // pred_check_branch
          %357 = sbr.rel (%p355) target = $region40
        $region39: #{tpu_custom_call.1} parent=27 // pred_region
          %s358 = smul.u32 4, %s20
          %s360 = ssub.s32 512, 512
          %361 = vsyncadd %s351, %s360
          %s362 = smul.addr %s358, 128
          %s363 = scalar_lea.hbm %s2, %s362
          %s364 = sshll.u32 %s354, 4
          %s365 = int_to_ptr.vmem [resolvable:$true] %s364
          %370 = dma.vmem_to_hbm [thread:$0]  %s365, 512, %s363, %s351, 128, 128, 8
        $region40: #{tpu_custom_call.1} parent=27 // pred_fallthru
          _
      $region28: #{tpu_custom_call.1} parent=5 // pred_fallthru
        _
      %p371 = scmp.le.s32.totalorder 2, %s15
      // Predicated region
      $region41: #{tpu_custom_call.1} parent=5 // pred_check
        %p372 = pneg %p371
      $region42: #{tpu_custom_call.1} parent=5 // pred_check_branch
        %374 = sbr.rel (%p372) target = $region44
      $region43: #{tpu_custom_call.1} parent=5 // pred_region
        %s375 = ssub.s32 %s15, 2
        // Predicated region
        $region45: #{tpu_custom_call.1} parent=43 // pred_check
          %p376 = pneg %p91
        $region46: #{tpu_custom_call.1} parent=43 // pred_check_branch
          %378 = sbr.rel (%p376) target = $region48
        $region47: #{tpu_custom_call.1} parent=43 // pred_region
          %s379 = sand.u32 %s76, 1
          %s380 = scalar_lea.sflag [#allocation4], %s379
          %s381 = sand.u32 %s76, 1
          %s382 = smul.addr %s381, 32
          %s383 = scalar_lea.vmem [#allocation7], %s382
          %384 = dma.done %s380, 512
        $region48: #{tpu_custom_call.1} parent=43 // pred_fallthru
          _
      $region44: #{tpu_custom_call.1} parent=5 // pred_fallthru
        _
    $region6: #{tpu_custom_call.1} parent=1 // loop_footer
      %s19 = sadd.s32 1, %s15
    $region7: #{tpu_custom_call.1} parent=1 // loop_footer_branch
      %14 = sbr.rel target = $region3
    $region8: #{tpu_custom_call.1} parent=1 // loop_exit
      _
    %385 = vsyncpa [#allocation3], 1
    %s386 = scalar_lea.sflag [#allocation3], 1
    %387 = vsyncpa %s386, 1
    %388 = vsyncpa [#allocation6], 1
    %389 = vsyncpa [#allocation4], 1
    %s390 = scalar_lea.sflag [#allocation4], 1
    %391 = vsyncpa %s390, 1

</llo_original>
